<compile_context>
chip_gen: v6e
topology: v6e:2x2x1
jax: 0.10.0
libtpu: 0.0.40
codegen_flags: <defaults>
</compile_context>

<pallas_src>
import functools
import math

import jax
import jax.numpy as jnp
from jax.experimental import pallas as pl
from jax.experimental.pallas import tpu as pltpu


def _conv1x1_9_kernel(x_ref, w_ref, b_ref, o_ref, *, inv9):
    # x_ref: (1, C_in, Lt)      input tile, flattened spatial on the lane axis
    # w_ref: (9, C_out, C_in)   all nine 1x1 weights
    # b_ref: (9, C_out, 1)      all nine biases (column vectors)
    # o_ref: (1, C_out, Lt)     output tile
    w_eff = jnp.sum(w_ref[...].astype(jnp.float32), axis=0) * inv9   # (C_out, C_in)
    b_eff = jnp.sum(b_ref[...].astype(jnp.float32), axis=0) * inv9   # (C_out, 1)

    # Single MXU matmul; operands stay in the input dtype, accumulate in f32.
    y = jnp.dot(w_eff.astype(x_ref.dtype), x_ref[0],
                preferred_element_type=jnp.float32)                  # (C_out, Lt)
    y = y + b_eff                                                    # lane broadcast
    o_ref[...] = y[None].astype(o_ref.dtype)


def conv_1x1_9_forward(x, weights, biases, *, max_lane_tile=2048):
    """x: (N, C_in, H, W); weights: (9, C_out, C_in, 1, 1); biases: (9, C_out).

    Returns (N, C_out, H, W) = sum_i conv1x1(x, W_i, b_i) / 9.
    """
    N, C_in, H, W = x.shape
    C_out = weights.shape[1]
    L = H * W

    # Flatten spatial (free reshape on contiguous NCHW) and zero-pad the lane
    # axis to a multiple of the tile size (itself a multiple of 128).
    L128 = pl.cdiv(L, 128) * 128
    lt = min(max_lane_tile, L128)
    L_pad = pl.cdiv(L, lt) * lt
    x2 = x.reshape(N, C_in, L)
    if L_pad != L:
        x2 = jnp.pad(x2, ((0, 0), (0, 0), (0, L_pad - L)))

    w_stacked = weights.reshape(9, C_out, C_in)
    b_stacked = biases.reshape(9, C_out, 1)

    kernel = functools.partial(_conv1x1_9_kernel, inv9=1.0 / 9.0)

    out = pl.pallas_call(
        kernel,
        out_shape=jax.ShapeDtypeStruct((N, C_out, L_pad), x.dtype),
        grid_spec=pltpu.PrefetchScalarGridSpec(
            num_scalar_prefetch=0,
            grid=(N, L_pad // lt),
            in_specs=[
                pl.BlockSpec((1, C_in, lt), lambda n, l: (n, 0, l)),
                pl.BlockSpec((9, C_out, C_in), lambda n, l: (0, 0, 0)),
                pl.BlockSpec((9, C_out, 1), lambda n, l: (0, 0, 0)),
            ],
            out_specs=pl.BlockSpec((1, C_out, lt), lambda n, l: (n, 0, l)),
        ),
        compiler_params=pltpu.CompilerParams(
            dimension_semantics=("parallel", "parallel")),
    )(x2, w_stacked, b_stacked)

    return out[:, :, :L].reshape(N, C_out, H, W)


def _reference(x, weights, biases):
    """Literal nine-conv sum (matches the PyTorch forward)."""
    inv9 = 1.0 / 9.0
    y = None
    for i in range(9):
        wi = weights[i, :, :, 0, 0]                                   # (C_out, C_in)
        yi = jnp.einsum('oc,nchw->nohw', wi, x) \
            + biases[i][None, :, None, None]
        yi = yi * inv9
        y = yi if y is None else y + yi
    return y


if __name__ == "__main__":
    N, C_in, C_out, H, W = 2, 4, 4, 16, 16   # module forces kernel_size = 1

    key = jax.random.PRNGKey(0)
    kx, kw, kb = jax.random.split(key, 3)

    x = jax.random.normal(kx, (N, C_in, H, W), jnp.float32)
    bound = 1.0 / math.sqrt(C_in)            # fan_in of a 1x1 conv
    weights = jax.random.uniform(kw, (9, C_out, C_in, 1, 1), jnp.float32,
                                 minval=-bound, maxval=bound)
    biases = jax.random.uniform(kb, (9, C_out), jnp.float32,
                                minval=-bound, maxval=bound)

    out = conv_1x1_9_forward(x, weights, biases)
    out = jax.block_until_ready(out)

    ref = _reference(x, weights, biases)
    assert out.shape == (N, C_out, H, W)
    assert jnp.allclose(out, ref, atol=1e-4, rtol=1e-4), "mismatch vs reference"

    print("KERNEL_OK")
</pallas_src>

<mosaic_0001>
module attributes {stable_mosaic.version = 11 : i64} {
  func.func @_conv1x1_9_kernel(%arg0: i32, %arg1: i32, %arg2: memref<1x4x256xf32, #tpu.memory_space<vmem>>, %arg3: memref<9x4x4xf32, #tpu.memory_space<vmem>>, %arg4: memref<9x4x1xf32, #tpu.memory_space<vmem>>, %arg5: memref<1x4x256xf32, #tpu.memory_space<vmem>>) attributes {dimension_semantics = [#tpu.dimension_semantics<parallel>, #tpu.dimension_semantics<parallel>], iteration_bounds = array<i64: 2, 1>, scalar_prefetch = 0 : i64, scratch_operands = 0 : i64, tpu.core_type = #tpu.core_type<tc>, window_params = [{transform_indices = @transform_0, window_bounds = array<i64: 1, 4, 256>}, {pipeline_mode = #tpu.pipeline_mode<synchronous>, transform_indices = @transform_1, window_bounds = array<i64: 9, 4, 4>}, {pipeline_mode = #tpu.pipeline_mode<synchronous>, transform_indices = @transform_2, window_bounds = array<i64: 9, 4, 1>}, {transform_indices = @transform_3, window_bounds = array<i64: 1, 4, 256>}]} {
    %c0 = arith.constant 0 : index
    %c0_0 = arith.constant 0 : index
    %c0_1 = arith.constant 0 : index
    %0 = vector.load %arg3[%c0, %c0_0, %c0_1] : memref<9x4x4xf32, #tpu.memory_space<vmem>>, vector<9x4x4xf32>
    %cst = arith.constant dense<0.000000e+00> : vector<4x4xf32>
    %1 = vector.multi_reduction <add>, %0, %cst [0] : vector<9x4x4xf32> to vector<4x4xf32>
    %cst_2 = arith.constant 0.111111112 : f32
    %2 = vector.broadcast %cst_2 : f32 to vector<4x4xf32>
    %3 = arith.mulf %1, %2 : vector<4x4xf32>
    %c0_3 = arith.constant 0 : index
    %c0_4 = arith.constant 0 : index
    %c0_5 = arith.constant 0 : index
    %4 = vector.load %arg4[%c0_3, %c0_4, %c0_5] : memref<9x4x1xf32, #tpu.memory_space<vmem>>, vector<9x4x1xf32>
    %cst_6 = arith.constant dense<0.000000e+00> : vector<4x1xf32>
    %5 = vector.multi_reduction <add>, %4, %cst_6 [0] : vector<9x4x1xf32> to vector<4x1xf32>
    %cst_7 = arith.constant 0.111111112 : f32
    %6 = vector.broadcast %cst_7 : f32 to vector<4x1xf32>
    %7 = arith.mulf %5, %6 : vector<4x1xf32>
    %c0_8 = arith.constant 0 : index
    %c0_9 = arith.constant 0 : index
    %c0_10 = arith.constant 0 : index
    %8 = vector.load %arg2[%c0_8, %c0_9, %c0_10] : memref<1x4x256xf32, #tpu.memory_space<vmem>>, vector<1x4x256xf32>
    %9 = vector.shape_cast %8 : vector<1x4x256xf32> to vector<4x256xf32>
    %cst_11 = arith.constant dense<0.000000e+00> : vector<4x256xf32>
    %10 = tpu.matmul %3, %9, %cst_11 {dimension_numbers = #tpu.dot_dimension_numbers<[1], [0], [0], [1], [0, 0, 1, 1], [], []>} : vector<4x4xf32>, vector<4x256xf32>, vector<4x256xf32> -> vector<4x256xf32>
    %11 = vector.broadcast %7 : vector<4x1xf32> to vector<4x256xf32>
    %12 = arith.addf %10, %11 : vector<4x256xf32>
    %13 = vector.shape_cast %12 : vector<4x256xf32> to vector<1x4x256xf32>
    %c0_12 = arith.constant 0 : index
    %c0_13 = arith.constant 0 : index
    %c0_14 = arith.constant 0 : index
    %14 = vector.load %arg5[%c0_12, %c0_13, %c0_14] : memref<1x4x256xf32, #tpu.memory_space<vmem>>, vector<1x4x256xf32>
    tpu.vector_store %arg5[%c0_12, %c0_13, %c0_14], %13 {strides = array<i32>} : memref<1x4x256xf32, #tpu.memory_space<vmem>>, vector<1x4x256xf32>,
    return
  }
  func.func @transform_0(%arg0: i32, %arg1: i32) -> (i32, i32, i32) {
    %c0_i32 = arith.constant 0 : i32
    %c0_i32_0 = arith.constant 0 : i32
    return %arg0, %c0_i32, %arg1 : i32, i32, i32
  }
  func.func @transform_1(%arg0: i32, %arg1: i32) -> (i32, i32, i32) {
    %c0_i32 = arith.constant 0 : i32
    %c0_i32_0 = arith.constant 0 : i32
    %c0_i32_1 = arith.constant 0 : i32
    %c0_i32_2 = arith.constant 0 : i32
    return %c0_i32, %c0_i32_0, %c0_i32_1 : i32, i32, i32
  }
  func.func @transform_2(%arg0: i32, %arg1: i32) -> (i32, i32, i32) {
    %c0_i32 = arith.constant 0 : i32
    %c0_i32_0 = arith.constant 0 : i32
    %c0_i32_1 = arith.constant 0 : i32
    %c0_i32_2 = arith.constant 0 : i32
    return %c0_i32, %c0_i32_0, %c0_i32_1 : i32, i32, i32
  }
  func.func @transform_3(%arg0: i32, %arg1: i32) -> (i32, i32, i32) {
    %c0_i32 = arith.constant 0 : i32
    %c0_i32_0 = arith.constant 0 : i32
    return %arg0, %c0_i32, %arg1 : i32, i32, i32
  }
}

</mosaic_0001>

<llo_original>
// kernel: tpu_custom_call.1
$region0: #{tpu_custom_call.1}
  #allocation0 [shape = 'u32[]', space=smem, size = 0x4, offset = 0x4, fixed_abs, tag = 'smem constant byte address 0x4 - core index']
  #allocation1 [shape = 'u32[144,128]{1,0:T(1,128)}', space=vmem, size = 0x12000, scoped, tag = 'internal scratch']
  %s0 = inlined_call_operand.vmem [shape: f32[2,4,256], index: 0, kind: input, shape index: {}]
  %s1 = inlined_call_operand.vmem [shape: f32[9,4,4], index: 1, kind: input, shape index: {}]
  %s2 = inlined_call_operand.vmem [shape: f32[9,4,1], index: 2, kind: input, shape index: {}]
  %s3 = inlined_call_operand.hbm [shape: f32[2,4,256], index: 3, kind: output, shape index: {}]
  %s4 = sld [smem:[#allocation0]]
  $region45: #{tpu_custom_call.1} parent=0
    _
  %s6 = ssub.s32 1, %s4
  %s7 = scalar_select 0, %s6, %s4
  $region1: #{tpu_custom_call.1} parent=0
    #allocation2 [shape = 'u8[8192]{0}', space=vmem, size = 0x2000, scoped, tag = 'output window, operand 0']
    #allocation3 [shape = 's32[2]{0}', space=sflag, size = 0x8, scoped, tag = 'scoped memory for tpu_custom_call.1']
    %8 = vsyncpa [#allocation3], 0
    %s9 = scalar_lea.sflag [#allocation3], 1
    %10 = vsyncpa %s9, 0
    loop: start=0, step=1, limit=4
    $region2: #{tpu_custom_call.1} parent=1 // loop_pre_header
      _
    $region3: #{tpu_custom_call.1} parent=1 // loop_header
      %s12 = sphi 0, %s16
      %p13 = scmp.ge.s32.totalorder %s12, 4
      %s19 = sphi 0, %s31
      %s20 = sphi 0, %s27
      %s21 = sphi 0, %s19
      %s22 = sphi 0, %s20
      %s23 = sphi 0, %s21
      %s24 = sphi 0, %s22
      %s36 = sphi 0, %s38
      %s39 = sphi 0, %s36
      %s40 = sphi 0, %s39
      %s56 = sphi 0, %s40
      %s60 = sphi 0, %s60
      %s62 = sphi 0, %s60
      %s63 = sphi 0, %s62
      %s77 = sphi 0, %s63
      %s81 = sphi 0, %s81
      %s83 = sphi 0, %s81
      %s84 = sphi 0, %s83
      %s98 = sphi 0, %s84
      %s106 = sphi 0, %s108
      %s109 = sphi 0, %s106
      %s110 = sphi 0, %s109
      %s126 = sphi 0, %s110
    $region4: #{tpu_custom_call.1} parent=1 // loop_header_branch
      %15 = sbr.rel (%p13) target = $region8
    $region5: #{tpu_custom_call.1} parent=1 // loop_body
      %s17 = ssub.s32 %s12, 1
      %s18 = ssub.s32 %s12, 2
      %s25 = sadd.s32 1, %s20
      %p26 = scmp.ge.s32.totalorder %s25, 1
      %s27 = scalar_select %p26, 0, %s25
      %s28 = sadd.s32 1, %s19
      %s29 = scalar_select %p26, %s28, %s19
      %p30 = scmp.ge.s32.totalorder %s29, 2
      %s31 = scalar_select %p30, 0, %s29
      %s32 = ssub.s32 %s19, %s31
      %s33 = ssub.s32 %s20, %s27
      %s34 = sor.u32 %s32, %s33
      %p35 = scmp.eq.s32.totalorder %s34, 0
      %s37 = sadd.s32 %s36, 1
      %s38 = scalar_select %p35, %s36, %s37
      %p41 = pneg %p35
      %p42 = scmp.eq.s32.totalorder %s12, 1
      %p43 = por %p41, %p42
      %p44 = scmp.ne.s32.totalorder %s36, %s39
      %p45 = scmp.eq.s32.totalorder %s12, 0
      %p46 = por %p44, %p45
      %p47 = scmp.ne.s32.totalorder %s36, %s39
      %p48 = scmp.eq.s32.totalorder %s17, 1
      %p49 = por %p47, %p48
      %p50 = scmp.ne.s32.totalorder %s39, %s40
      %p51 = scmp.eq.s32.totalorder %s17, 0
      %p52 = por %p50, %p51
      %p53 = scmp.ne.s32.totalorder %s39, %s40
      %p54 = scmp.eq.s32.totalorder %s18, 1
      %p55 = por %p53, %p54
      %p57 = scmp.ne.s32.totalorder %s40, %s56
      %p58 = scmp.eq.s32.totalorder %s18, 0
      %p59 = por %p57, %p58
      %s61 = sadd.s32 %s60, 1
      %p64 = scmp.eq.s32.totalorder %s12, 1
      %p65 = scmp.ne.s32.totalorder %s60, %s62
      %p66 = scmp.eq.s32.totalorder %s12, 0
      %p67 = por %p65, %p66
      %p68 = scmp.ne.s32.totalorder %s60, %s62
      %p69 = scmp.eq.s32.totalorder %s17, 1
      %p70 = por %p68, %p69
      %p71 = scmp.ne.s32.totalorder %s62, %s63
      %p72 = scmp.eq.s32.totalorder %s17, 0
      %p73 = por %p71, %p72
      %p74 = scmp.ne.s32.totalorder %s62, %s63
      %p75 = scmp.eq.s32.totalorder %s18, 1
      %p76 = por %p74, %p75
      %p78 = scmp.ne.s32.totalorder %s63, %s77
      %p79 = scmp.eq.s32.totalorder %s18, 0
      %p80 = por %p78, %p79
      %s82 = sadd.s32 %s81, 1
      %p85 = scmp.eq.s32.totalorder %s12, 1
      %p86 = scmp.ne.s32.totalorder %s81, %s83
      %p87 = scmp.eq.s32.totalorder %s12, 0
      %p88 = por %p86, %p87
      %p89 = scmp.ne.s32.totalorder %s81, %s83
      %p90 = scmp.eq.s32.totalorder %s17, 1
      %p91 = por %p89, %p90
      %p92 = scmp.ne.s32.totalorder %s83, %s84
      %p93 = scmp.eq.s32.totalorder %s17, 0
      %p94 = por %p92, %p93
      %p95 = scmp.ne.s32.totalorder %s83, %s84
      %p96 = scmp.eq.s32.totalorder %s18, 1
      %p97 = por %p95, %p96
      %p99 = scmp.ne.s32.totalorder %s84, %s98
      %p100 = scmp.eq.s32.totalorder %s18, 0
      %p101 = por %p99, %p100
      %s102 = ssub.s32 %s19, %s31
      %s103 = ssub.s32 %s20, %s27
      %s104 = sor.u32 %s102, %s103
      %p105 = scmp.eq.s32.totalorder %s104, 0
      %s107 = sadd.s32 %s106, 1
      %s108 = scalar_select %p105, %s106, %s107
      %p111 = pneg %p105
      %p112 = scmp.eq.s32.totalorder %s12, 1
      %p113 = por %p111, %p112
      %p114 = scmp.ne.s32.totalorder %s106, %s109
      %p115 = scmp.eq.s32.totalorder %s12, 0
      %p116 = por %p114, %p115
      %p117 = scmp.ne.s32.totalorder %s106, %s109
      %p118 = scmp.eq.s32.totalorder %s17, 1
      %p119 = por %p117, %p118
      %p120 = scmp.ne.s32.totalorder %s109, %s110
      %p121 = scmp.eq.s32.totalorder %s17, 0
      %p122 = por %p120, %p121
      %p123 = scmp.ne.s32.totalorder %s109, %s110
      %p124 = scmp.eq.s32.totalorder %s18, 1
      %p125 = por %p123, %p124
      %p127 = scmp.ne.s32.totalorder %s110, %s126
      %p128 = scmp.eq.s32.totalorder %s18, 0
      %p129 = por %p127, %p128
      %p130 = scmp.le.s32.totalorder 1, %s12
      %p131 = scmp.lt.s32.totalorder %s12, 3
      %p132 = pnand %p130, %p131
      %p133 = pneg %p132
      // Predicated region
      $region9: #{tpu_custom_call.1} parent=5 // pred_check
        _
      $region10: #{tpu_custom_call.1} parent=5 // pred_check_branch
        %135 = sbr.rel (%p132) target = $region12
      $region11: #{tpu_custom_call.1} parent=5 // pred_region
        %s136 = ssub.s32 %s12, 1
        // Predicated region
        $region13: #{tpu_custom_call.1} parent=11 // pred_check
          %p137 = pneg %p73
        $region14: #{tpu_custom_call.1} parent=11 // pred_check_branch
          %139 = sbr.rel (%p137) target = $region16
        $region15: #{tpu_custom_call.1} parent=11 // pred_region
          _
        $region16: #{tpu_custom_call.1} parent=11 // pred_fallthru
          _
        // Predicated region
        $region17: #{tpu_custom_call.1} parent=11 // pred_check
          %p140 = pneg %p94
        $region18: #{tpu_custom_call.1} parent=11 // pred_check_branch
          %142 = sbr.rel (%p140) target = $region20
        $region19: #{tpu_custom_call.1} parent=11 // pred_region
          _
        $region20: #{tpu_custom_call.1} parent=11 // pred_fallthru
          _
      $region12: #{tpu_custom_call.1} parent=5 // pred_fallthru
        _
      %p143 = scmp.lt.s32.totalorder %s12, 2
      // Predicated region
      $region21: #{tpu_custom_call.1} parent=5 // pred_check
        %p144 = pneg %p143
      $region22: #{tpu_custom_call.1} parent=5 // pred_check_branch
        %146 = sbr.rel (%p144) target = $region24
      $region23: #{tpu_custom_call.1} parent=5 // pred_region
        // Predicated region
        $region25: #{tpu_custom_call.1} parent=23 // pred_check
          %p147 = pneg %p46
        $region26: #{tpu_custom_call.1} parent=23 // pred_check_branch
          %149 = sbr.rel (%p147) target = $region28
        $region27: #{tpu_custom_call.1} parent=23 // pred_region
          %s150 = smul.u32 2, %s20
          %p151 = scmp.lt.s32.totalorder %s19, 1
          %s152 = scalar_select %p151, %s19, 1
          %p153 = scmp.lt.s32.totalorder %s150, 1
          %s154 = scalar_select %p153, %s150, 1
          %s155 = smul.addr %s152, 2
          %s156 = sadd.s32 %s154, %s155
          %s157 = smul.addr %s156, 4
          %s158 = scalar_lea.vmem %s0, %s157
          %s159 = smul.u32 2, %s20
        $region28: #{tpu_custom_call.1} parent=23 // pred_fallthru
          _
      $region24: #{tpu_custom_call.1} parent=5 // pred_fallthru
        _
      %p160 = scmp.le.s32.totalorder 1, %s12
      %p161 = scmp.lt.s32.totalorder %s12, 3
      %p162 = pnand %p160, %p161
      %p163 = pneg %p162
      // Predicated region
      $region29: #{tpu_custom_call.1} parent=5 // pred_check
        _
      $region30: #{tpu_custom_call.1} parent=5 // pred_check_branch
        %165 = sbr.rel (%p162) target = $region32
      $region31: #{tpu_custom_call.1} parent=5 // pred_region
        %s166 = ssub.s32 %s12, 1
        %s167 = smul.u32 2, %s22
        %p168 = scmp.lt.s32.totalorder %s21, 1
        %s169 = scalar_select %p168, %s21, 1
        %p170 = scmp.lt.s32.totalorder %s167, 1
        %s171 = scalar_select %p170, %s167, 1
        %s172 = smul.addr %s169, 2
        %s173 = sadd.s32 %s171, %s172
        %s174 = smul.addr %s173, 4
        %s175 = scalar_lea.vmem %s0, %s174
        %p176 = pneg %p52
        %p177 = pneg %p49
        %p178 = pneg %p73
        %p179 = pneg %p70
        %p180 = pneg %p94
        %p181 = pneg %p91
        %p182 = pneg %p122
        %p183 = pneg %p119
        %s184 = sand.u32 %s109, 1
        %s185 = scalar_lea.sflag [#allocation3], %s184
        %s186 = sand.u32 %s109, 1
        %s187 = smul.addr %s186, 8
        %s188 = scalar_lea.vmem [#allocation2], %s187
        %s189 = smul.u32 2, %s22
        %p190 = scmp.lt.s32.totalorder %s21, 1
        %s191 = scalar_select %p190, %s21, 1
        %p192 = scmp.lt.s32.totalorder %s189, 1
        %s193 = scalar_select %p192, %s189, 1
        %s194 = smul.addr %s191, 2
        %s195 = sadd.s32 %s193, %s194
        %s196 = smul.addr %s195, 4
        %s197 = scalar_lea.vmem %s0, %s196
        %s198 = smul.u32 2, %s22
        %s199 = smul.u32 2, %s22
        %v200 = vld [vmem:[%s1] sm:$0xf]
        %v201 = vld [vmem:[%s1 + $0x4] sm:$0xf]
        %v202 = vld [vmem:[%s1 + $0x8] sm:$0xf]
        %v203 = vld [vmem:[%s1 + $0xc] sm:$0xf]
        %v204 = vld [vmem:[%s1 + $0x10] sm:$0xf]
        %v205 = vld [vmem:[%s1 + $0x14] sm:$0xf]
        %v206 = vld [vmem:[%s1 + $0x18] sm:$0xf]
        %v207 = vld [vmem:[%s1 + $0x1c] sm:$0xf]
        %v208 = vld [vmem:[%s1 + $0x20] sm:$0xf]
        %vm209 = vcmask 27648
        %v210 = vsel %vm209, %v200, 0.0
        %v211 = vsel %vm209, %v201, 0.0
        %v212 = vadd.f32 %v210, %v211
        %v213 = vsel %vm209, %v202, 0.0
        %v214 = vadd.f32 %v212, %v213
        %v215 = vsel %vm209, %v203, 0.0
        %v216 = vadd.f32 %v214, %v215
        %v217 = vsel %vm209, %v204, 0.0
        %v218 = vadd.f32 %v216, %v217
        %v219 = vsel %vm209, %v205, 0.0
        %v220 = vadd.f32 %v218, %v219
        %v221 = vsel %vm209, %v206, 0.0
        %v222 = vadd.f32 %v220, %v221
        %v223 = vsel %vm209, %v207, 0.0
        %v224 = vadd.f32 %v222, %v223
        %v225 = vsel %vm209, %v208, 0.0
        %v226 = vadd.f32 %v224, %v225
        %v227 = vmul.f32 %v226, 0.11111111
        %v228 = vld [vmem:[%s2] sm:$0xf]
        %v229 = vld [vmem:[%s2 + $0x4] sm:$0xf]
        %v230 = vld [vmem:[%s2 + $0x8] sm:$0xf]
        %v231 = vld [vmem:[%s2 + $0xc] sm:$0xf]
        %v232 = vld [vmem:[%s2 + $0x10] sm:$0xf]
        %v233 = vld [vmem:[%s2 + $0x14] sm:$0xf]
        %v234 = vld [vmem:[%s2 + $0x18] sm:$0xf]
        %v235 = vld [vmem:[%s2 + $0x1c] sm:$0xf]
        %v236 = vld [vmem:[%s2 + $0x20] sm:$0xf]
        %vm237 = vcmask 3072
        %v238 = vsel %vm237, %v228, 0.0
        %v239 = vsel %vm237, %v229, 0.0
        %v240 = vadd.f32 %v238, %v239
        %v241 = vsel %vm237, %v230, 0.0
        %v242 = vadd.f32 %v240, %v241
        %v243 = vsel %vm237, %v231, 0.0
        %v244 = vadd.f32 %v242, %v243
        %v245 = vsel %vm237, %v232, 0.0
        %v246 = vadd.f32 %v244, %v245
        %v247 = vsel %vm237, %v233, 0.0
        %v248 = vadd.f32 %v246, %v247
        %v249 = vsel %vm237, %v234, 0.0
        %v250 = vadd.f32 %v248, %v249
        %v251 = vsel %vm237, %v235, 0.0
        %v252 = vadd.f32 %v250, %v251
        %v253 = vsel %vm237, %v236, 0.0
        %v254 = vadd.f32 %v252, %v253
        %v255 = vmul.f32 %v254, 0.11111111
        %v256 = vld [vmem:[%s197] sm:$0xff]
        %258 = vset.pattern.permute.xlu0 0
        %259 = vperm.xlu0 %258, %v255
        %v260 = vpop.permute.xlu0 %259
        %v263 = vcombine.high %v256, %v256
        %vm264 = vcmask 31744
        %v266 = vsel %vm264, %v227, 0
        %vm268 = vcmask 1043456
        %v269 = vsel %vm268, %v256, 0
        %v271 = vsel %vm268, %v263, 0
        %273 = vmatprep.subr.mxu0 0.0
        %274 = vmatpush1.msra.mxu0 0.0
        %275 = vmatprep.subr.mxu0 0.0
        %276 = vmatpush1.msra.mxu0 0.0
        %277 = vmatprep.subr.mxu0 0.0
        %278 = vmatpush1.msra.mxu0 0.0
        %279 = vmatprep.subr.mxu0 0.0
        %280 = vmatpush1.msra.mxu0 0.0
        %281 = vmatprep.subr.mxu0 0.0
        %282 = vmatpush1.msra.mxu0 0.0
        %283 = vmatprep.subr.mxu0 0.0
        %284 = vmatpush1.msra.mxu0 0.0
        %285 = vmatprep.subr.mxu0 0.0
        %286 = vmatpush1.msra.mxu0 0.0
        %287 = vmatprep.subr.mxu0 0.0
        %288 = vmatpush1.msra.mxu0 0.0
        %289 = vmatprep.subr.mxu0 0.0
        %290 = vmatpush1.msra.mxu0 0.0
        %291 = vmatprep.subr.mxu0 0.0
        %292 = vmatpush1.msra.mxu0 0.0
        %293 = vmatprep.subr.mxu0 0.0
        %294 = vmatpush1.msra.mxu0 0.0
        %295 = vmatprep.subr.mxu0 0.0
        %296 = vmatpush1.msra.mxu0 0.0
        %297 = vmatprep.subr.mxu0 0.0
        %298 = vmatpush1.msra.mxu0 0.0
        %299 = vmatprep.subr.mxu0 0.0
        %300 = vmatpush1.msra.mxu0 0.0
        %301 = vmatprep.subr.mxu0 0.0
        %302 = vmatpush1.msra.mxu0 0.0
        %303 = vmatprep.subr.mxu0 %v271
        %304 = vmatpush1.msra.mxu0 %v269
        %305 = vmatprep.subr.mxu0 0.0
        %306 = vmatpush2.msra.mxu0 0.0
        %307 = vmatprep.subr.mxu0 0.0
        %308 = vmatpush2.msra.mxu0 0.0
        %309 = vmatprep.subr.mxu0 0.0
        %310 = vmatpush2.msra.mxu0 0.0
        %311 = vmatprep.subr.mxu0 0.0
        %312 = vmatpush2.msra.mxu0 0.0
        %313 = vmatprep.subr.mxu0 0.0
        %314 = vmatpush2.msra.mxu0 0.0
        %315 = vmatprep.subr.mxu0 0.0
        %316 = vmatpush2.msra.mxu0 0.0
        %317 = vmatprep.subr.mxu0 0.0
        %318 = vmatpush2.msra.mxu0 0.0
        %319 = vmatprep.subr.mxu0 0.0
        %320 = vmatpush2.msra.mxu0 0.0
        %321 = vmatprep.subr.mxu0 0.0
        %322 = vmatpush2.msra.mxu0 0.0
        %323 = vmatprep.subr.mxu0 0.0
        %324 = vmatpush2.msra.mxu0 0.0
        %325 = vmatprep.subr.mxu0 0.0
        %326 = vmatpush2.msra.mxu0 0.0
        %327 = vmatprep.subr.mxu0 0.0
        %328 = vmatpush2.msra.mxu0 0.0
        %329 = vmatprep.subr.mxu0 0.0
        %330 = vmatpush2.msra.mxu0 0.0
        %331 = vmatprep.subr.mxu0 0.0
        %332 = vmatpush2.msra.mxu0 0.0
        %333 = vmatprep.subr.mxu0 0.0
        %334 = vmatpush2.msra.mxu0 0.0
        %335 = vmatprep.subr.mxu0 0.0
        %336 = vmatpush2.msra.mxu0 0.0
        %337 = vmatprep.mubr.f32.mxu0 0.0
        %338 = vmatmul.mubr.f32.gmra.mxu0 %v266
        %v339 = vpop.f32.mrf.mxu0
        %v340 = vadd.f32 %v260, %v339
        %v341 = vpop.f32.mrf.mxu0
        %v342 = vadd.f32 %v260, %v341
        %343 = vdwg.mxu0
        %v346 = vcombine.low %v340, %v342
        %348 = vst [vmem:[%s188] sm:$0xff] %v346
        %s349 = sand.u32 %s109, 1
        %s350 = scalar_lea.sflag [#allocation3], %s349
        %s351 = sand.u32 %s109, 1
        %s352 = smul.addr %s351, 8
        %s353 = scalar_lea.vmem [#allocation2], %s352
        // Predicated region
        $region33: #{tpu_custom_call.1} parent=31 // pred_check
          %p354 = pneg %p119
        $region34: #{tpu_custom_call.1} parent=31 // pred_check_branch
          %356 = sbr.rel (%p354) target = $region36
        $region35: #{tpu_custom_call.1} parent=31 // pred_region
          %s357 = smul.u32 2, %s22
          %s359 = ssub.s32 128, 128
          %360 = vsyncadd %s350, %s359
          %s361 = smul.addr %s21, 2
          %s362 = sadd.s32 %s357, %s361
          %s363 = smul.addr %s362, 64
          %s364 = scalar_lea.hbm %s3, %s363
          %s366 = sshll.u32 %s353, 4
          %s367 = int_to_ptr.vmem [resolvable:$true] %s366
          %369 = dma.vmem_to_hbm [thread:$0]  %s367, 128, %s364, %s350
        $region36: #{tpu_custom_call.1} parent=31 // pred_fallthru
          _
      $region32: #{tpu_custom_call.1} parent=5 // pred_fallthru
        _
      %p370 = scmp.le.s32.totalorder 2, %s12
      // Predicated region
      $region37: #{tpu_custom_call.1} parent=5 // pred_check
        %p371 = pneg %p370
      $region38: #{tpu_custom_call.1} parent=5 // pred_check_branch
        %373 = sbr.rel (%p371) target = $region40
      $region39: #{tpu_custom_call.1} parent=5 // pred_region
        %s374 = ssub.s32 %s12, 2
        // Predicated region
        $region41: #{tpu_custom_call.1} parent=39 // pred_check
          %p375 = pneg %p125
        $region42: #{tpu_custom_call.1} parent=39 // pred_check_branch
          %377 = sbr.rel (%p375) target = $region44
        $region43: #{tpu_custom_call.1} parent=39 // pred_region
          %s378 = sand.u32 %s110, 1
          %s379 = scalar_lea.sflag [#allocation3], %s378
          %s380 = sand.u32 %s110, 1
          %s381 = smul.addr %s380, 8
          %s382 = scalar_lea.vmem [#allocation2], %s381
          %383 = dma.done %s379, 128
        $region44: #{tpu_custom_call.1} parent=39 // pred_fallthru
          _
      $region40: #{tpu_custom_call.1} parent=5 // pred_fallthru
        _
    $region6: #{tpu_custom_call.1} parent=1 // loop_footer
      %s16 = sadd.s32 1, %s12
    $region7: #{tpu_custom_call.1} parent=1 // loop_footer_branch
      %11 = sbr.rel target = $region3
    $region8: #{tpu_custom_call.1} parent=1 // loop_exit
      _
    %384 = vsyncpa [#allocation3], 1
    %s385 = scalar_lea.sflag [#allocation3], 1
    %386 = vsyncpa %s385, 1

</llo_original>
